<compile_context>
chip_gen: v6e
topology: v6e:2x2x1
jax: 0.10.0
libtpu: 0.0.40
codegen_flags: <defaults>
</compile_context>

<pallas_src>
import math

import jax
import jax.numpy as jnp
from jax.experimental import pallas as pl
from jax.experimental.pallas import tpu as pltpu


def _round_up(x, m):
    return ((x + m - 1) // m) * m


def _glu_kernel(x_ref, w4_ref, b4_ref, w5_ref, b5_ref, o_ref):
    """One (tm, K) row tile of x against (K, tn) slices of both projections."""
    x = x_ref[...]                                   # [tm, K], original dtype
    if x.dtype != w4_ref.dtype:                      # bf16 MXU feed (cheap VPU cast)
        x = x.astype(w4_ref.dtype)
    # Two MXU matmuls, f32 accumulation; bias add + sigmoid*gate stay in f32.
    l4 = jnp.dot(x, w4_ref[...], preferred_element_type=jnp.float32) + b4_ref[...]
    l5 = jnp.dot(x, w5_ref[...], preferred_element_type=jnp.float32) + b5_ref[...]
    o_ref[...] = (jax.nn.sigmoid(l4) * l5).astype(o_ref.dtype)


def prepare_glu_params(w4, b4, w5, b5, compute_dtype=jnp.bfloat16):
    """One-time param prep (hoist out of the hot path): cast weights to the MXU
    feed dtype and reshape biases to [1, H] f32.  glu_forward accepts either
    prepared or raw params (casts are guarded by dtype checks)."""
    H = w4.shape[-1]
    wd = compute_dtype if compute_dtype is not None else w4.dtype
    return (w4.astype(wd), b4.reshape(1, H).astype(jnp.float32),
            w5.astype(wd), b5.reshape(1, H).astype(jnp.float32))


def glu_forward(x, w4, b4, w5, b5, *, block_rows=512, compute_dtype=jnp.bfloat16):
    """x: [..., input_size]; w4/w5: [input_size, hidden]; b4/b5: [hidden] or [1, hidden]."""
    lead_shape = x.shape[:-1]
    K = x.shape[-1]
    H = w4.shape[-1]
    out_dtype = x.dtype

    x2d = x.reshape(-1, K)           # no padded copy of the big operand
    M = x2d.shape[0]

    # Param prep is a no-op if prepare_glu_params was already applied.
    if compute_dtype is not None and w4.dtype != compute_dtype:
        w4 = w4.astype(compute_dtype)
        w5 = w5.astype(compute_dtype)
    b4 = b4.reshape(1, H).astype(jnp.float32)
    b5 = b5.reshape(1, H).astype(jnp.float32)

    # --- Row (M) tiling: balanced tiles (last tile nearly full), and >=2 grid
    # steps whenever M > 8 so both v7x TensorCores get work. The ragged last
    # tile is handled by Pallas masking (no cross-row reduction in the body).
    n_m = max(pl.cdiv(M, block_rows), min(2, pl.cdiv(M, 8)))
    tm = _round_up(pl.cdiv(M, n_m), 8)
    n_m = pl.cdiv(M, tm)

    x_it = jnp.dtype(x.dtype).itemsize
    w_it = jnp.dtype(w4.dtype).itemsize
    o_it = jnp.dtype(out_dtype).itemsize
    Kp, Hp = _round_up(K, 128), _round_up(H, 128)    # internal (8,128) layout padding

    # Per-generation VMEM budget: 75% of physical (~48 MiB v7x, ~96 MiB v5e/v6e).
    try:
        vmem_cap = int(pltpu.get_tpu_info().vmem_capacity_bytes)
    except Exception:  # conservative fallback
        vmem_cap = 64 << 20
    vmem_cap_usable = (vmem_cap * 3) // 4

    resident_w_bytes = 2 * Kp * Hp * w_it            # W4 + W5, single buffered
    weight_budget = min(16 << 20, vmem_cap_usable // 3)

    if resident_w_bytes <= weight_budget:
        # ---- Path A (common case): weights/biases whole-array resident in VMEM
        # (single buffered); only x / out row tiles are pipelined over the grid.
        grid = (n_m,)
        in_specs = [
            pl.BlockSpec((tm, K), lambda i: (i, 0)),                 # x: streamed
            pl.BlockSpec(memory_space=pltpu.MemorySpace.VMEM),       # W4: resident
            pl.BlockSpec(memory_space=pltpu.MemorySpace.VMEM),       # b4: resident
            pl.BlockSpec(memory_space=pltpu.MemorySpace.VMEM),       # W5: resident
            pl.BlockSpec(memory_space=pltpu.MemorySpace.VMEM),       # b5: resident
        ]
        out_specs = pl.BlockSpec((tm, H), lambda i: (i, 0))
        dim_sem = ("parallel",)
        vmem_need = (2 * tm * Kp * x_it                # x tiles (double buffered)
                     + 2 * tm * Hp * o_it              # out tiles (double buffered)
                     + resident_w_bytes                # W4 + W5
                     + 2 * 8 * Hp * 4                  # biases (sublane padded)
                     + 3 * tm * Hp * 4)                # f32 l4 / l5 / gate temps
    else:
        # ---- Path B: hidden-dim tiling fallback for large input*hidden so the
        # weight working set stays bounded (matters first on v7x's 64 MiB VMEM).
        tn = max(128, ((weight_budget // (4 * Kp * w_it)) // 128) * 128)
        tn = min(tn, Hp)
        n_h = pl.cdiv(H, tn)
        grid = (n_m, n_h)                              # j (H tiles) is the inner axis,
        in_specs = [                                   # so the x tile is fetched once per i.
            pl.BlockSpec((tm, K), lambda i, j: (i, 0)),
            pl.BlockSpec((K, tn), lambda i, j: (0, j)),
            pl.BlockSpec((1, tn), lambda i, j: (0, j)),
            pl.BlockSpec((K, tn), lambda i, j: (0, j)),
            pl.BlockSpec((1, tn), lambda i, j: (0, j)),
        ]
        out_specs = pl.BlockSpec((tm, tn), lambda i, j: (i, j))
        dim_sem = ("parallel", "parallel")
        vmem_need = (2 * tm * Kp * x_it
                     + 2 * tm * tn * o_it
                     + 2 * 2 * Kp * tn * w_it          # double-buffered weight blocks
                     + 2 * 2 * 8 * tn * 4              # bias blocks
                     + 3 * tm * tn * 4)                # f32 temps

    vmem_limit = int(min(max(vmem_need + (4 << 20), 32 << 20), vmem_cap_usable))

    out = pl.pallas_call(
        _glu_kernel,
        out_shape=jax.ShapeDtypeStruct((M, H), out_dtype),
        grid=grid,
        in_specs=in_specs,
        out_specs=out_specs,
        compiler_params=pltpu.CompilerParams(
            dimension_semantics=dim_sem,
            vmem_limit_bytes=vmem_limit,
        ),
    )(x2d, w4, b4, w5, b5)

    return out.reshape(*lead_shape, H)


def init_glu_params(key, input_size, hidden_size, dtype=jnp.float32):
    """Deterministic init mimicking nn.Linear's uniform(-1/sqrt(in), 1/sqrt(in)).
    Weights are returned already transposed to [input_size, hidden_size]."""
    k4w, k4b, k5w, k5b = jax.random.split(key, 4)
    bound = 1.0 / math.sqrt(input_size)
    w4 = jax.random.uniform(k4w, (input_size, hidden_size), dtype, -bound, bound)
    b4 = jax.random.uniform(k4b, (1, hidden_size), dtype, -bound, bound)
    w5 = jax.random.uniform(k5w, (input_size, hidden_size), dtype, -bound, bound)
    b5 = jax.random.uniform(k5b, (1, hidden_size), dtype, -bound, bound)
    return w4, b4, w5, b5


if __name__ == "__main__":
    key = jax.random.PRNGKey(0)
    kx, kp, kx2 = jax.random.split(key, 3)

    # --- small shape consistent with the module ---
    batch, seq, input_size, hidden_size = 2, 8, 32, 32
    x = jax.random.normal(kx, (batch, seq, input_size), jnp.float32)
    w4, b4, w5, b5 = init_glu_params(kp, input_size, hidden_size)

    # Pure-JAX reference.
    y_ref = jax.nn.sigmoid(x @ w4 + b4[0]) * (x @ w5 + b5[0])

    # Exact f32 path.
    y_f32 = glu_forward(x, w4, b4, w5, b5, compute_dtype=None)
    jax.block_until_ready(y_f32)
    assert y_f32.shape == (batch, seq, hidden_size)
    assert jnp.allclose(y_f32, y_ref, atol=1e-5, rtol=1e-5)

    # Default fast path: bf16 MXU feed (weights pre-cast once), f32 accumulation.
    pw4, pb4, pw5, pb5 = prepare_glu_params(w4, b4, w5, b5)
    y_bf16 = glu_forward(x, pw4, pb4, pw5, pb5)
    jax.block_until_ready(y_bf16)
    assert jnp.allclose(y_bf16, y_ref, atol=2e-2, rtol=2e-2)

    # Ragged / unaligned shapes: M not a multiple of the row tile, K/H not 128.
    b2, s2, k2, h2 = 1, 5, 20, 24
    x2 = jax.random.normal(kx2, (b2, s2, k2), jnp.float32)
    w4b, b4b, w5b, b5b = init_glu_params(kp, k2, h2)
    y2_ref = jax.nn.sigmoid(x2 @ w4b + b4b[0]) * (x2 @ w5b + b5b[0])
    y2 = glu_forward(x2, w4b, b4b, w5b, b5b, compute_dtype=None)
    jax.block_until_ready(y2)
    assert y2.shape == (b2, s2, h2)
    assert jnp.allclose(y2, y2_ref, atol=1e-5, rtol=1e-5)

    print("KERNEL_OK")
</pallas_src>

<mosaic_0001>
module attributes {stable_mosaic.version = 11 : i64} {
  func.func @_glu_kernel(%arg0: i32, %arg1: memref<8x32xf32, #tpu.memory_space<vmem>>, %arg2: memref<32x32xf32, #tpu.memory_space<vmem>>, %arg3: memref<1x32xf32, #tpu.memory_space<vmem>>, %arg4: memref<32x32xf32, #tpu.memory_space<vmem>>, %arg5: memref<1x32xf32, #tpu.memory_space<vmem>>, %arg6: memref<8x32xf32, #tpu.memory_space<vmem>>) attributes {dimension_semantics = [#tpu.dimension_semantics<parallel>], iteration_bounds = array<i64: 2>, scalar_prefetch = 0 : i64, scratch_operands = 0 : i64, tpu.core_type = #tpu.core_type<tc>, window_params = [{transform_indices = @transform_0, window_bounds = array<i64: 8, 32>}, {pipeline_mode = #tpu.pipeline_mode<synchronous>, transform_indices = @transform_1, window_bounds = array<i64: 32, 32>}, {pipeline_mode = #tpu.pipeline_mode<synchronous>, transform_indices = @transform_2, window_bounds = array<i64: 1, 32>}, {pipeline_mode = #tpu.pipeline_mode<synchronous>, transform_indices = @transform_3, window_bounds = array<i64: 32, 32>}, {pipeline_mode = #tpu.pipeline_mode<synchronous>, transform_indices = @transform_4, window_bounds = array<i64: 1, 32>}, {transform_indices = @transform_5, window_bounds = array<i64: 8, 32>}]} {
    %c0 = arith.constant 0 : index
    %c0_0 = arith.constant 0 : index
    %0 = vector.load %arg1[%c0, %c0_0] : memref<8x32xf32, #tpu.memory_space<vmem>>, vector<8x32xf32>
    %c0_1 = arith.constant 0 : index
    %c0_2 = arith.constant 0 : index
    %1 = vector.load %arg2[%c0_1, %c0_2] : memref<32x32xf32, #tpu.memory_space<vmem>>, vector<32x32xf32>
    %cst = arith.constant dense<0.000000e+00> : vector<8x32xf32>
    %2 = tpu.matmul %0, %1, %cst {dimension_numbers = #tpu.dot_dimension_numbers<[1], [0], [0], [1], [0, 0, 1, 1], [], []>} : vector<8x32xf32>, vector<32x32xf32>, vector<8x32xf32> -> vector<8x32xf32>
    %c0_3 = arith.constant 0 : index
    %c0_4 = arith.constant 0 : index
    %3 = vector.load %arg3[%c0_3, %c0_4] : memref<1x32xf32, #tpu.memory_space<vmem>>, vector<1x32xf32>
    %4 = vector.broadcast %3 : vector<1x32xf32> to vector<8x32xf32>
    %5 = arith.addf %2, %4 : vector<8x32xf32>
    %c0_5 = arith.constant 0 : index
    %c0_6 = arith.constant 0 : index
    %6 = vector.load %arg4[%c0_5, %c0_6] : memref<32x32xf32, #tpu.memory_space<vmem>>, vector<32x32xf32>
    %cst_7 = arith.constant dense<0.000000e+00> : vector<8x32xf32>
    %7 = tpu.matmul %0, %6, %cst_7 {dimension_numbers = #tpu.dot_dimension_numbers<[1], [0], [0], [1], [0, 0, 1, 1], [], []>} : vector<8x32xf32>, vector<32x32xf32>, vector<8x32xf32> -> vector<8x32xf32>
    %c0_8 = arith.constant 0 : index
    %c0_9 = arith.constant 0 : index
    %8 = vector.load %arg5[%c0_8, %c0_9] : memref<1x32xf32, #tpu.memory_space<vmem>>, vector<1x32xf32>
    %9 = vector.broadcast %8 : vector<1x32xf32> to vector<8x32xf32>
    %10 = arith.addf %7, %9 : vector<8x32xf32>
    %11 = arith.negf %5 : vector<8x32xf32>
    %12 = math.exp %11 : vector<8x32xf32>
    %cst_10 = arith.constant 1.000000e+00 : f32
    %13 = vector.broadcast %cst_10 : f32 to vector<8x32xf32>
    %14 = arith.addf %13, %12 : vector<8x32xf32>
    %15 = arith.divf %13, %14 : vector<8x32xf32>
    %16 = arith.mulf %15, %10 : vector<8x32xf32>
    %c0_11 = arith.constant 0 : index
    %c0_12 = arith.constant 0 : index
    %17 = vector.load %arg6[%c0_11, %c0_12] : memref<8x32xf32, #tpu.memory_space<vmem>>, vector<8x32xf32>
    tpu.vector_store %arg6[%c0_11, %c0_12], %16 {strides = array<i32>} : memref<8x32xf32, #tpu.memory_space<vmem>>, vector<8x32xf32>,
    return
  }
  func.func @transform_0(%arg0: i32) -> (i32, i32) {
    %c0_i32 = arith.constant 0 : i32
    %c0_i32_0 = arith.constant 0 : i32
    return %arg0, %c0_i32 : i32, i32
  }
  func.func @transform_1(%arg0: i32) -> (i32, i32) {
    %c0_i32 = arith.constant 0 : i32
    %c0_i32_0 = arith.constant 0 : i32
    %c0_i32_1 = arith.constant 0 : i32
    return %c0_i32, %c0_i32_0 : i32, i32
  }
  func.func @transform_2(%arg0: i32) -> (i32, i32) {
    %c0_i32 = arith.constant 0 : i32
    %c0_i32_0 = arith.constant 0 : i32
    %c0_i32_1 = arith.constant 0 : i32
    return %c0_i32, %c0_i32_0 : i32, i32
  }
  func.func @transform_3(%arg0: i32) -> (i32, i32) {
    %c0_i32 = arith.constant 0 : i32
    %c0_i32_0 = arith.constant 0 : i32
    %c0_i32_1 = arith.constant 0 : i32
    return %c0_i32, %c0_i32_0 : i32, i32
  }
  func.func @transform_4(%arg0: i32) -> (i32, i32) {
    %c0_i32 = arith.constant 0 : i32
    %c0_i32_0 = arith.constant 0 : i32
    %c0_i32_1 = arith.constant 0 : i32
    return %c0_i32, %c0_i32_0 : i32, i32
  }
  func.func @transform_5(%arg0: i32) -> (i32, i32) {
    %c0_i32 = arith.constant 0 : i32
    %c0_i32_0 = arith.constant 0 : i32
    return %arg0, %c0_i32 : i32, i32
  }
}

</mosaic_0001>

<llo_original>
// kernel: tpu_custom_call.1
$region0: #{tpu_custom_call.1}
  #allocation0 [shape = 'u32[]', space=smem, size = 0x4, offset = 0x4, fixed_abs, tag = 'smem constant byte address 0x4 - core index']
  #allocation1 [shape = 'u32[144,128]{1,0:T(1,128)}', space=vmem, size = 0x12000, scoped, tag = 'internal scratch']
  %s0 = inlined_call_operand.hbm [shape: f32[16,32], index: 0, kind: input, shape index: {}]
  %s1 = inlined_call_operand.hbm [shape: f32[32,32], index: 1, kind: input, shape index: {}]
  %s2 = inlined_call_operand.vmem [shape: f32[1,32], index: 2, kind: input, shape index: {}]
  %s3 = inlined_call_operand.hbm [shape: f32[32,32], index: 3, kind: input, shape index: {}]
  %s4 = inlined_call_operand.vmem [shape: f32[1,32], index: 4, kind: input, shape index: {}]
  %s5 = inlined_call_operand.hbm [shape: f32[16,32], index: 5, kind: output, shape index: {}]
  %s6 = sld [smem:[#allocation0]]
  $region65: #{tpu_custom_call.1} parent=0
    _
  %s8 = ssub.s32 1, %s6
  %s9 = scalar_select 0, %s8, %s6
  $region1: #{tpu_custom_call.1} parent=0
    #allocation2 [shape = 'u8[8192]{0}', space=vmem, size = 0x2000, scoped, tag = 'input window, operand 0']
    #allocation3 [shape = 's32[2]{0}', space=sflag, size = 0x8, scoped, tag = 'scoped memory for tpu_custom_call.1']
    #allocation4 [shape = 's32[2]{0}', space=sflag, size = 0x8, scoped, tag = 'scoped memory for tpu_custom_call.1']
    #allocation5 [shape = 'u8[16384]{0}', space=vmem, size = 0x4000, scoped, tag = 'input window, operand 1, single buffered']
    #allocation6 [shape = 's32[1]{0}', space=sflag, size = 0x4, scoped, tag = 'scoped memory for tpu_custom_call.1']
    #allocation7 [shape = 'u8[16384]{0}', space=vmem, size = 0x4000, scoped, tag = 'input window, operand 3, single buffered']
    #allocation8 [shape = 'u8[8192]{0}', space=vmem, size = 0x2000, scoped, tag = 'output window, operand 0']
    %10 = vsyncpa [#allocation3], 0
    %s11 = scalar_lea.sflag [#allocation3], 1
    %12 = vsyncpa %s11, 0
    %13 = vsyncpa [#allocation6], 0
    %14 = vsyncpa [#allocation4], 0
    %s15 = scalar_lea.sflag [#allocation4], 1
    %16 = vsyncpa %s15, 0
    loop: start=0, step=1, limit=4
    $region2: #{tpu_custom_call.1} parent=1 // loop_pre_header
      _
    $region3: #{tpu_custom_call.1} parent=1 // loop_header
      %s18 = sphi 0, %s22
      %p19 = scmp.ge.s32.totalorder %s18, 4
      %s28 = sphi 0, %s30
      %s31 = sphi 0, %s28
      %s32 = sphi 0, %s31
      %s48 = sphi 0, %s32
      %s52 = sphi 0, %s52
      %s54 = sphi 0, %s52
      %s55 = sphi 0, %s54
      %s69 = sphi 0, %s55
      %s73 = sphi 0, %s73
      %s75 = sphi 0, %s73
      %s76 = sphi 0, %s75
      %s90 = sphi 0, %s76
      %s94 = sphi 0, %s94
      %s96 = sphi 0, %s94
      %s97 = sphi 0, %s96
      %s111 = sphi 0, %s97
      %s115 = sphi 0, %s115
      %s117 = sphi 0, %s115
      %s118 = sphi 0, %s117
      %s132 = sphi 0, %s118
      %s138 = sphi 0, %s140
      %s141 = sphi 0, %s138
      %s142 = sphi 0, %s141
      %s158 = sphi 0, %s142
    $region4: #{tpu_custom_call.1} parent=1 // loop_header_branch
      %21 = sbr.rel (%p19) target = $region8
    $region5: #{tpu_custom_call.1} parent=1 // loop_body
      %s23 = ssub.s32 %s18, 1
      %s24 = ssub.s32 %s18, 2
      %s25 = sadd.s32 %s18, 1
      %s26 = ssub.s32 %s18, %s25
      %p27 = scmp.eq.s32.totalorder %s26, 0
      %s29 = sadd.s32 %s28, 1
      %s30 = scalar_select %p27, %s28, %s29
      %p33 = pneg %p27
      %p34 = scmp.eq.s32.totalorder %s18, 1
      %p35 = por %p33, %p34
      %p36 = scmp.ne.s32.totalorder %s28, %s31
      %p37 = scmp.eq.s32.totalorder %s18, 0
      %p38 = por %p36, %p37
      %p39 = scmp.ne.s32.totalorder %s28, %s31
      %p40 = scmp.eq.s32.totalorder %s23, 1
      %p41 = por %p39, %p40
      %p42 = scmp.ne.s32.totalorder %s31, %s32
      %p43 = scmp.eq.s32.totalorder %s23, 0
      %p44 = por %p42, %p43
      %p45 = scmp.ne.s32.totalorder %s31, %s32
      %p46 = scmp.eq.s32.totalorder %s24, 1
      %p47 = por %p45, %p46
      %p49 = scmp.ne.s32.totalorder %s32, %s48
      %p50 = scmp.eq.s32.totalorder %s24, 0
      %p51 = por %p49, %p50
      %s53 = sadd.s32 %s52, 1
      %p56 = scmp.eq.s32.totalorder %s18, 1
      %p57 = scmp.ne.s32.totalorder %s52, %s54
      %p58 = scmp.eq.s32.totalorder %s18, 0
      %p59 = por %p57, %p58
      %p60 = scmp.ne.s32.totalorder %s52, %s54
      %p61 = scmp.eq.s32.totalorder %s23, 1
      %p62 = por %p60, %p61
      %p63 = scmp.ne.s32.totalorder %s54, %s55
      %p64 = scmp.eq.s32.totalorder %s23, 0
      %p65 = por %p63, %p64
      %p66 = scmp.ne.s32.totalorder %s54, %s55
      %p67 = scmp.eq.s32.totalorder %s24, 1
      %p68 = por %p66, %p67
      %p70 = scmp.ne.s32.totalorder %s55, %s69
      %p71 = scmp.eq.s32.totalorder %s24, 0
      %p72 = por %p70, %p71
      %s74 = sadd.s32 %s73, 1
      %p77 = scmp.eq.s32.totalorder %s18, 1
      %p78 = scmp.ne.s32.totalorder %s73, %s75
      %p79 = scmp.eq.s32.totalorder %s18, 0
      %p80 = por %p78, %p79
      %p81 = scmp.ne.s32.totalorder %s73, %s75
      %p82 = scmp.eq.s32.totalorder %s23, 1
      %p83 = por %p81, %p82
      %p84 = scmp.ne.s32.totalorder %s75, %s76
      %p85 = scmp.eq.s32.totalorder %s23, 0
      %p86 = por %p84, %p85
      %p87 = scmp.ne.s32.totalorder %s75, %s76
      %p88 = scmp.eq.s32.totalorder %s24, 1
      %p89 = por %p87, %p88
      %p91 = scmp.ne.s32.totalorder %s76, %s90
      %p92 = scmp.eq.s32.totalorder %s24, 0
      %p93 = por %p91, %p92
      %s95 = sadd.s32 %s94, 1
      %p98 = scmp.eq.s32.totalorder %s18, 1
      %p99 = scmp.ne.s32.totalorder %s94, %s96
      %p100 = scmp.eq.s32.totalorder %s18, 0
      %p101 = por %p99, %p100
      %p102 = scmp.ne.s32.totalorder %s94, %s96
      %p103 = scmp.eq.s32.totalorder %s23, 1
      %p104 = por %p102, %p103
      %p105 = scmp.ne.s32.totalorder %s96, %s97
      %p106 = scmp.eq.s32.totalorder %s23, 0
      %p107 = por %p105, %p106
      %p108 = scmp.ne.s32.totalorder %s96, %s97
      %p109 = scmp.eq.s32.totalorder %s24, 1
      %p110 = por %p108, %p109
      %p112 = scmp.ne.s32.totalorder %s97, %s111
      %p113 = scmp.eq.s32.totalorder %s24, 0
      %p114 = por %p112, %p113
      %s116 = sadd.s32 %s115, 1
      %p119 = scmp.eq.s32.totalorder %s18, 1
      %p120 = scmp.ne.s32.totalorder %s115, %s117
      %p121 = scmp.eq.s32.totalorder %s18, 0
      %p122 = por %p120, %p121
      %p123 = scmp.ne.s32.totalorder %s115, %s117
      %p124 = scmp.eq.s32.totalorder %s23, 1
      %p125 = por %p123, %p124
      %p126 = scmp.ne.s32.totalorder %s117, %s118
      %p127 = scmp.eq.s32.totalorder %s23, 0
      %p128 = por %p126, %p127
      %p129 = scmp.ne.s32.totalorder %s117, %s118
      %p130 = scmp.eq.s32.totalorder %s24, 1
      %p131 = por %p129, %p130
      %p133 = scmp.ne.s32.totalorder %s118, %s132
      %p134 = scmp.eq.s32.totalorder %s24, 0
      %p135 = por %p133, %p134
      %s136 = ssub.s32 %s18, %s25
      %p137 = scmp.eq.s32.totalorder %s136, 0
      %s139 = sadd.s32 %s138, 1
      %s140 = scalar_select %p137, %s138, %s139
      %p143 = pneg %p137
      %p144 = scmp.eq.s32.totalorder %s18, 1
      %p145 = por %p143, %p144
      %p146 = scmp.ne.s32.totalorder %s138, %s141
      %p147 = scmp.eq.s32.totalorder %s18, 0
      %p148 = por %p146, %p147
      %p149 = scmp.ne.s32.totalorder %s138, %s141
      %p150 = scmp.eq.s32.totalorder %s23, 1
      %p151 = por %p149, %p150
      %p152 = scmp.ne.s32.totalorder %s141, %s142
      %p153 = scmp.eq.s32.totalorder %s23, 0
      %p154 = por %p152, %p153
      %p155 = scmp.ne.s32.totalorder %s141, %s142
      %p156 = scmp.eq.s32.totalorder %s24, 1
      %p157 = por %p155, %p156
      %p159 = scmp.ne.s32.totalorder %s142, %s158
      %p160 = scmp.eq.s32.totalorder %s24, 0
      %p161 = por %p159, %p160
      %p162 = scmp.le.s32.totalorder 1, %s18
      %p163 = scmp.lt.s32.totalorder %s18, 3
      %p164 = pnand %p162, %p163
      %p165 = pneg %p164
      // Predicated region
      $region9: #{tpu_custom_call.1} parent=5 // pred_check
        _
      $region10: #{tpu_custom_call.1} parent=5 // pred_check_branch
        %167 = sbr.rel (%p164) target = $region12
      $region11: #{tpu_custom_call.1} parent=5 // pred_region
        %s168 = ssub.s32 %s18, 1
        // Predicated region
        $region13: #{tpu_custom_call.1} parent=11 // pred_check
          %p169 = pneg %p65
        $region14: #{tpu_custom_call.1} parent=11 // pred_check_branch
          %171 = sbr.rel (%p169) target = $region16
        $region15: #{tpu_custom_call.1} parent=11 // pred_region
          %s173 = ssub.s32 512, 512
          %174 = vsyncadd [#allocation6], %s173
          %s175 = sshll.u32 [#allocation5], 4
          %s176 = int_to_ptr.vmem [resolvable:$true] %s175
          %181 = dma.hbm_to_vmem [thread:$0]  %s1, 512, %s176, [#allocation6], 128, 128, 8
        $region16: #{tpu_custom_call.1} parent=11 // pred_fallthru
          _
        // Predicated region
        $region17: #{tpu_custom_call.1} parent=11 // pred_check
          %p182 = pneg %p86
        $region18: #{tpu_custom_call.1} parent=11 // pred_check_branch
          %184 = sbr.rel (%p182) target = $region20
        $region19: #{tpu_custom_call.1} parent=11 // pred_region
          _
        $region20: #{tpu_custom_call.1} parent=11 // pred_fallthru
          _
        // Predicated region
        $region21: #{tpu_custom_call.1} parent=11 // pred_check
          %p185 = pneg %p107
        $region22: #{tpu_custom_call.1} parent=11 // pred_check_branch
          %187 = sbr.rel (%p185) target = $region24
        $region23: #{tpu_custom_call.1} parent=11 // pred_region
          %s189 = ssub.s32 512, 512
          %190 = vsyncadd [#allocation6], %s189
          %s191 = sshll.u32 [#allocation7], 4
          %s192 = int_to_ptr.vmem [resolvable:$true] %s191
          %197 = dma.hbm_to_vmem [thread:$0]  %s3, 512, %s192, [#allocation6], 128, 128, 8
        $region24: #{tpu_custom_call.1} parent=11 // pred_fallthru
          _
        // Predicated region
        $region25: #{tpu_custom_call.1} parent=11 // pred_check
          %p198 = pneg %p128
        $region26: #{tpu_custom_call.1} parent=11 // pred_check_branch
          %200 = sbr.rel (%p198) target = $region28
        $region27: #{tpu_custom_call.1} parent=11 // pred_region
          _
        $region28: #{tpu_custom_call.1} parent=11 // pred_fallthru
          _
      $region12: #{tpu_custom_call.1} parent=5 // pred_fallthru
        _
      %p201 = scmp.lt.s32.totalorder %s18, 2
      // Predicated region
      $region29: #{tpu_custom_call.1} parent=5 // pred_check
        %p202 = pneg %p201
      $region30: #{tpu_custom_call.1} parent=5 // pred_check_branch
        %204 = sbr.rel (%p202) target = $region32
      $region31: #{tpu_custom_call.1} parent=5 // pred_region
        // Predicated region
        $region33: #{tpu_custom_call.1} parent=31 // pred_check
          %p205 = pneg %p38
        $region34: #{tpu_custom_call.1} parent=31 // pred_check_branch
          %207 = sbr.rel (%p205) target = $region36
        $region35: #{tpu_custom_call.1} parent=31 // pred_region
          %s208 = sand.u32 %s28, 1
          %s209 = scalar_lea.sflag [#allocation3], %s208
          %s210 = sand.u32 %s28, 1
          %s211 = smul.addr %s210, 8
          %s212 = scalar_lea.vmem [#allocation2], %s211
          %s214 = ssub.s32 128, 128
          %215 = vsyncadd %s209, %s214
          %s216 = smul.addr %s18, 128
          %s217 = scalar_lea.hbm %s0, %s216
          %s219 = sshll.u32 %s212, 4
          %s220 = int_to_ptr.vmem [resolvable:$true] %s219
          %222 = dma.hbm_to_vmem [thread:$0]  %s217, 128, %s220, %s209
        $region36: #{tpu_custom_call.1} parent=31 // pred_fallthru
          _
      $region32: #{tpu_custom_call.1} parent=5 // pred_fallthru
        _
      %p223 = scmp.le.s32.totalorder 1, %s18
      %p224 = scmp.lt.s32.totalorder %s18, 3
      %p225 = pnand %p223, %p224
      %p226 = pneg %p225
      // Predicated region
      $region37: #{tpu_custom_call.1} parent=5 // pred_check
        _
      $region38: #{tpu_custom_call.1} parent=5 // pred_check_branch
        %228 = sbr.rel (%p225) target = $region40
      $region39: #{tpu_custom_call.1} parent=5 // pred_region
        %s229 = ssub.s32 %s18, 1
        %s230 = sand.u32 %s31, 1
        %s231 = scalar_lea.sflag [#allocation3], %s230
        %s232 = sand.u32 %s31, 1
        %s233 = smul.addr %s232, 8
        %s234 = scalar_lea.vmem [#allocation2], %s233
        // Predicated region
        $region41: #{tpu_custom_call.1} parent=39 // pred_check
          %p235 = pneg %p44
        $region42: #{tpu_custom_call.1} parent=39 // pred_check_branch
          %237 = sbr.rel (%p235) target = $region44
        $region43: #{tpu_custom_call.1} parent=39 // pred_region
          %238 = dma.done %s231, 128
        $region44: #{tpu_custom_call.1} parent=39 // pred_fallthru
          _
        // Predicated region
        $region45: #{tpu_custom_call.1} parent=39 // pred_check
          %p239 = pneg %p65
        $region46: #{tpu_custom_call.1} parent=39 // pred_check_branch
          %241 = sbr.rel (%p239) target = $region48
        $region47: #{tpu_custom_call.1} parent=39 // pred_region
          %242 = dma.done [#allocation6], 512
        $region48: #{tpu_custom_call.1} parent=39 // pred_fallthru
          _
        // Predicated region
        $region49: #{tpu_custom_call.1} parent=39 // pred_check
          %p243 = pneg %p107
        $region50: #{tpu_custom_call.1} parent=39 // pred_check_branch
          %245 = sbr.rel (%p243) target = $region52
        $region51: #{tpu_custom_call.1} parent=39 // pred_region
          %246 = dma.done [#allocation6], 512
        $region52: #{tpu_custom_call.1} parent=39 // pred_fallthru
          _
        %s247 = sand.u32 %s31, 1
        %s248 = scalar_lea.sflag [#allocation3], %s247
        %s249 = sand.u32 %s31, 1
        %s250 = smul.addr %s249, 8
        %s251 = scalar_lea.vmem [#allocation2], %s250
        %p252 = pneg %p44
        %p253 = pneg %p41
        %p254 = pneg %p65
        %p255 = pneg %p62
        %p256 = pneg %p86
        %p257 = pneg %p83
        %p258 = pneg %p107
        %p259 = pneg %p104
        %p260 = pneg %p128
        %p261 = pneg %p125
        %p262 = pneg %p154
        %p263 = pneg %p151
        %s264 = sand.u32 %s141, 1
        %s265 = scalar_lea.sflag [#allocation4], %s264
        %s266 = sand.u32 %s141, 1
        %s267 = smul.addr %s266, 8
        %s268 = scalar_lea.vmem [#allocation8], %s267
        %v269 = vld [vmem:[%s234] sm:$0xff]
        %v270 = vld [vmem:[#allocation5] sm:$0xff]
        %v271 = vld [vmem:[#allocation5 + $0x8] sm:$0xff]
        %v272 = vld [vmem:[#allocation5 + $0x10] sm:$0xff]
        %v273 = vld [vmem:[#allocation5 + $0x18] sm:$0xff]
        %v274 = vld [vmem:[%s2] sm:$0x1]
        %v276 = vlaneseq
        %v277 = vshrl.u32 %v276, 7
        %v278 = vsub.s32 0, %v277
        %v279 = vrot.slane %v274, %v278
        %vm281 = vcmask 261120
        %v283 = vsel %vm281, %v269, 0
        %285 = vmatprep.subr.mxu0 0.0
        %286 = vmatpush1.msra.mxu0 0.0
        %287 = vmatprep.subr.mxu0 0.0
        %288 = vmatpush1.msra.mxu0 0.0
        %289 = vmatprep.subr.mxu0 0.0
        %290 = vmatpush1.msra.mxu0 0.0
        %291 = vmatprep.subr.mxu0 0.0
        %292 = vmatpush1.msra.mxu0 0.0
        %293 = vmatprep.subr.mxu0 0.0
        %294 = vmatpush1.msra.mxu0 0.0
        %295 = vmatprep.subr.mxu0 0.0
        %296 = vmatpush1.msra.mxu0 0.0
        %297 = vmatprep.subr.mxu0 0.0
        %298 = vmatpush1.msra.mxu0 0.0
        %299 = vmatprep.subr.mxu0 0.0
        %300 = vmatpush1.msra.mxu0 0.0
        %301 = vmatprep.subr.mxu0 0.0
        %302 = vmatpush1.msra.mxu0 0.0
        %303 = vmatprep.subr.mxu0 0.0
        %304 = vmatpush1.msra.mxu0 0.0
        %305 = vmatprep.subr.mxu0 0.0
        %306 = vmatpush1.msra.mxu0 0.0
        %307 = vmatprep.subr.mxu0 0.0
        %308 = vmatpush1.msra.mxu0 0.0
        %309 = vmatprep.subr.mxu0 0.0
        %310 = vmatpush1.msra.mxu0 %v273
        %311 = vmatprep.subr.mxu0 0.0
        %312 = vmatpush1.msra.mxu0 %v272
        %313 = vmatprep.subr.mxu0 0.0
        %314 = vmatpush1.msra.mxu0 %v271
        %315 = vmatprep.subr.mxu0 0.0
        %316 = vmatpush1.msra.mxu0 %v270
        %317 = vmatprep.subr.mxu0 0.0
        %318 = vmatpush2.msra.mxu0 0.0
        %319 = vmatprep.subr.mxu0 0.0
        %320 = vmatpush2.msra.mxu0 0.0
        %321 = vmatprep.subr.mxu0 0.0
        %322 = vmatpush2.msra.mxu0 0.0
        %323 = vmatprep.subr.mxu0 0.0
        %324 = vmatpush2.msra.mxu0 0.0
        %325 = vmatprep.subr.mxu0 0.0
        %326 = vmatpush2.msra.mxu0 0.0
        %327 = vmatprep.subr.mxu0 0.0
        %328 = vmatpush2.msra.mxu0 0.0
        %329 = vmatprep.subr.mxu0 0.0
        %330 = vmatpush2.msra.mxu0 0.0
        %331 = vmatprep.subr.mxu0 0.0
        %332 = vmatpush2.msra.mxu0 0.0
        %333 = vmatprep.subr.mxu0 0.0
        %334 = vmatpush2.msra.mxu0 0.0
        %335 = vmatprep.subr.mxu0 0.0
        %336 = vmatpush2.msra.mxu0 0.0
        %337 = vmatprep.subr.mxu0 0.0
        %338 = vmatpush2.msra.mxu0 0.0
        %339 = vmatprep.subr.mxu0 0.0
        %340 = vmatpush2.msra.mxu0 0.0
        %341 = vmatprep.subr.mxu0 0.0
        %342 = vmatpush2.msra.mxu0 0.0
        %343 = vmatprep.subr.mxu0 0.0
        %344 = vmatpush2.msra.mxu0 0.0
        %345 = vmatprep.subr.mxu0 0.0
        %346 = vmatpush2.msra.mxu0 0.0
        %347 = vmatprep.subr.mxu0 0.0
        %348 = vmatpush2.msra.mxu0 0.0
        %349 = vmatprep.mubr.f32.mxu0 0.0
        %350 = vmatmul.mubr.f32.gmra.mxu0 %v283
        %v351 = vpop.f32.mrf.mxu0
        %v352 = vadd.f32 %v279, %v351
        %v353 = vpop.f32.mrf.mxu0
        %354 = vdwg.mxu0
        %v355 = vld [vmem:[#allocation7] sm:$0xff]
        %v356 = vld [vmem:[#allocation7 + $0x8] sm:$0xff]
        %v357 = vld [vmem:[#allocation7 + $0x10] sm:$0xff]
        %v358 = vld [vmem:[#allocation7 + $0x18] sm:$0xff]
        %v359 = vld [vmem:[%s4] sm:$0x1]
        %v361 = vlaneseq
        %v362 = vshrl.u32 %v361, 7
        %v363 = vsub.s32 0, %v362
        %v364 = vrot.slane %v359, %v363
        %366 = vmatprep.subr.mxu0 0.0
        %367 = vmatpush1.msra.mxu0 0.0
        %368 = vmatprep.subr.mxu0 0.0
        %369 = vmatpush1.msra.mxu0 0.0
        %370 = vmatprep.subr.mxu0 0.0
        %371 = vmatpush1.msra.mxu0 0.0
        %372 = vmatprep.subr.mxu0 0.0
        %373 = vmatpush1.msra.mxu0 0.0
        %374 = vmatprep.subr.mxu0 0.0
        %375 = vmatpush1.msra.mxu0 0.0
        %376 = vmatprep.subr.mxu0 0.0
        %377 = vmatpush1.msra.mxu0 0.0
        %378 = vmatprep.subr.mxu0 0.0
        %379 = vmatpush1.msra.mxu0 0.0
        %380 = vmatprep.subr.mxu0 0.0
        %381 = vmatpush1.msra.mxu0 0.0
        %382 = vmatprep.subr.mxu0 0.0
        %383 = vmatpush1.msra.mxu0 0.0
        %384 = vmatprep.subr.mxu0 0.0
        %385 = vmatpush1.msra.mxu0 0.0
        %386 = vmatprep.subr.mxu0 0.0
        %387 = vmatpush1.msra.mxu0 0.0
        %388 = vmatprep.subr.mxu0 0.0
        %389 = vmatpush1.msra.mxu0 0.0
        %390 = vmatprep.subr.mxu0 0.0
        %391 = vmatpush1.msra.mxu0 %v358
        %392 = vmatprep.subr.mxu0 0.0
        %393 = vmatpush1.msra.mxu0 %v357
        %394 = vmatprep.subr.mxu0 0.0
        %395 = vmatpush1.msra.mxu0 %v356
        %396 = vmatprep.subr.mxu0 0.0
        %397 = vmatpush1.msra.mxu0 %v355
        %398 = vmatprep.subr.mxu0 0.0
        %399 = vmatpush2.msra.mxu0 0.0
        %400 = vmatprep.subr.mxu0 0.0
        %401 = vmatpush2.msra.mxu0 0.0
        %402 = vmatprep.subr.mxu0 0.0
        %403 = vmatpush2.msra.mxu0 0.0
        %404 = vmatprep.subr.mxu0 0.0
        %405 = vmatpush2.msra.mxu0 0.0
        %406 = vmatprep.subr.mxu0 0.0
        %407 = vmatpush2.msra.mxu0 0.0
        %408 = vmatprep.subr.mxu0 0.0
        %409 = vmatpush2.msra.mxu0 0.0
        %410 = vmatprep.subr.mxu0 0.0
        %411 = vmatpush2.msra.mxu0 0.0
        %412 = vmatprep.subr.mxu0 0.0
        %413 = vmatpush2.msra.mxu0 0.0
        %414 = vmatprep.subr.mxu0 0.0
        %415 = vmatpush2.msra.mxu0 0.0
        %416 = vmatprep.subr.mxu0 0.0
        %417 = vmatpush2.msra.mxu0 0.0
        %418 = vmatprep.subr.mxu0 0.0
        %419 = vmatpush2.msra.mxu0 0.0
        %420 = vmatprep.subr.mxu0 0.0
        %421 = vmatpush2.msra.mxu0 0.0
        %422 = vmatprep.subr.mxu0 0.0
        %423 = vmatpush2.msra.mxu0 0.0
        %424 = vmatprep.subr.mxu0 0.0
        %425 = vmatpush2.msra.mxu0 0.0
        %426 = vmatprep.subr.mxu0 0.0
        %427 = vmatpush2.msra.mxu0 0.0
        %428 = vmatprep.subr.mxu0 0.0
        %429 = vmatpush2.msra.mxu0 0.0
        %430 = vmatprep.mubr.f32.mxu0 0.0
        %431 = vmatmul.mubr.f32.gmra.mxu0 %v283
        %v432 = vpop.f32.mrf.mxu0
        %v433 = vadd.f32 %v364, %v432
        %v434 = vpop.f32.mrf.mxu0
        %435 = vdwg.mxu0
        %v436 = vxor.u32 %v352, 2147483648
        %v437 = vmul.f32 %v436, 1.442695
        %v438 = vpow.pop %v437
        %v439 = vadd.f32 %v438, 1.0
        %v440 = vrcp.pop %v439
        %v441 = vmul.f32 1.0, %v440
        %v442 = vmul.f32 %v441, %v433
        %443 = vst.msk [vmem:[%s268] sm:$0xff] %vm281, %v442
        %s444 = sand.u32 %s141, 1
        %s445 = scalar_lea.sflag [#allocation4], %s444
        %s446 = sand.u32 %s141, 1
        %s447 = smul.addr %s446, 8
        %s448 = scalar_lea.vmem [#allocation8], %s447
        // Predicated region
        $region53: #{tpu_custom_call.1} parent=39 // pred_check
          %p449 = pneg %p151
        $region54: #{tpu_custom_call.1} parent=39 // pred_check_branch
          %451 = sbr.rel (%p449) target = $region56
        $region55: #{tpu_custom_call.1} parent=39 // pred_region
          %s453 = ssub.s32 128, 128
          %454 = vsyncadd %s445, %s453
          %s455 = smul.addr %s23, 128
          %s456 = scalar_lea.hbm %s5, %s455
          %s458 = sshll.u32 %s448, 4
          %s459 = int_to_ptr.vmem [resolvable:$true] %s458
          %461 = dma.vmem_to_hbm [thread:$0]  %s459, 128, %s456, %s445
        $region56: #{tpu_custom_call.1} parent=39 // pred_fallthru
          _
      $region40: #{tpu_custom_call.1} parent=5 // pred_fallthru
        _
      %p462 = scmp.le.s32.totalorder 2, %s18
      // Predicated region
      $region57: #{tpu_custom_call.1} parent=5 // pred_check
        %p463 = pneg %p462
      $region58: #{tpu_custom_call.1} parent=5 // pred_check_branch
        %465 = sbr.rel (%p463) target = $region60
      $region59: #{tpu_custom_call.1} parent=5 // pred_region
        %s466 = ssub.s32 %s18, 2
        // Predicated region
        $region61: #{tpu_custom_call.1} parent=59 // pred_check
          %p467 = pneg %p157
        $region62: #{tpu_custom_call.1} parent=59 // pred_check_branch
          %469 = sbr.rel (%p467) target = $region64
        $region63: #{tpu_custom_call.1} parent=59 // pred_region
          %s470 = sand.u32 %s142, 1
          %s471 = scalar_lea.sflag [#allocation4], %s470
          %s472 = sand.u32 %s142, 1
          %s473 = smul.addr %s472, 8
          %s474 = scalar_lea.vmem [#allocation8], %s473
          %475 = dma.done %s471, 128
        $region64: #{tpu_custom_call.1} parent=59 // pred_fallthru
          _
      $region60: #{tpu_custom_call.1} parent=5 // pred_fallthru
        _
    $region6: #{tpu_custom_call.1} parent=1 // loop_footer
      %s22 = sadd.s32 1, %s18
    $region7: #{tpu_custom_call.1} parent=1 // loop_footer_branch
      %17 = sbr.rel target = $region3
    $region8: #{tpu_custom_call.1} parent=1 // loop_exit
      _
    %476 = vsyncpa [#allocation3], 1
    %s477 = scalar_lea.sflag [#allocation3], 1
    %478 = vsyncpa %s477, 1
    %479 = vsyncpa [#allocation6], 1
    %480 = vsyncpa [#allocation4], 1
    %s481 = scalar_lea.sflag [#allocation4], 1
    %482 = vsyncpa %s481, 1

</llo_original>
